<compile_context>
chip_gen: v7x
topology: tpu7x:2x2x1
jax: 0.10.0
libtpu: 0.0.40
codegen_flags: <defaults>
</compile_context>

<pallas_src>
import functools

import jax
import jax.numpy as jnp
from jax.experimental import pallas as pl
from jax.experimental.pallas import tpu as pltpu


def _stats_kernel(x_ref, idx_ref, feat_ref, wfc_ref, bfc_ref, wms_ref, bms_ref,
                  aff_ref, y_ref, sum_ref, sumsq_ref, cnt_ref, *, n_total):
    i = pl.program_id(0)
    tile_n = x_ref.shape[1]
    B = feat_ref.shape[0]
    outC = wfc_ref.shape[0]

    @pl.when(i == 0)
    def _():
        sum_ref[...] = jnp.zeros_like(sum_ref)
        sumsq_ref[...] = jnp.zeros_like(sumsq_ref)
        cnt_ref[...] = jnp.zeros_like(cnt_ref)

    # fc: yT = Wfc^T(outC,inC) @ xT(inC,tile_n) + b   (channels on sublanes, points on lanes)
    y = jnp.dot(wfc_ref[...], x_ref[...],
                preferred_element_type=jnp.float32) + bfc_ref[...]        # (outC, tile_n)

    # Valid-column mask: guards the padded tail block when N % tile_n != 0.
    col = i * tile_n + jax.lax.broadcasted_iota(jnp.int32, (1, tile_n), 1)
    valid = col < n_total                                                 # (1, tile_n) bool
    y = jnp.where(valid, y, 0.0)

    # Persist y for pass 2 (lane-dense store, no FC recompute / x re-read later).
    y_ref[...] = y

    # Lane-dense one-hot (B, tile_n): groups on sublanes, points on lanes.
    gid = jax.lax.broadcasted_iota(jnp.int32, (B, tile_n), 0)
    oh = jnp.where((gid == idx_ref[...]) & valid, 1.0, 0.0)               # (B, tile_n)

    # Per-group partials via transposed-contraction matmuls (contract the point/lane axis)
    # plus a lane reduction for counts — no payload staging scratch.
    dn = (((1,), (1,)), ((), ()))
    sum_ref[...] += jax.lax.dot_general(oh, y, dn,
                                        preferred_element_type=jnp.float32)      # (B, outC)
    sumsq_ref[...] += jax.lax.dot_general(oh, y * y, dn,
                                          preferred_element_type=jnp.float32)    # (B, outC)
    cnt_ref[...] += jnp.sum(oh, axis=1, keepdims=True)                           # (B, 1)

    @pl.when(i == pl.num_programs(0) - 1)
    def _():
        inv_c = 1.0 / jnp.maximum(cnt_ref[...], 1.0)                      # (B, 1)
        mean = sum_ref[...] * inv_c                                       # (B, outC)
        var = jnp.maximum(sumsq_ref[...] * inv_c - mean * mean, 0.0)
        inv_std = jax.lax.rsqrt(var + 1e-14)                              # EUP, matches eps
        # Fused mu||sig projection of the per-group origin features.
        musig = jnp.dot(feat_ref[...], wms_ref[...],
                        preferred_element_type=jnp.float32) + bms_ref[...]  # (B, 2*outC)
        scale = musig[:, outC:] * inv_std            # sig * rsqrt(var + eps)
        shift = musig[:, :outC] - mean * scale       # mu  - mean * scale
        aff_ref[:, :outC] = scale
        aff_ref[:, outC:] = shift


def _apply_kernel(y_ref, idx_ref, aff_ref, out_ref):
    outC, tile_n = y_ref.shape
    B = aff_ref.shape[1]

    idxv = idx_ref[...]                               # (1, tile_n) int32
    aff = aff_ref[...]                                # (2*outC, B)

    # B-way unrolled select against the tiny affine table — no one-hot, no MXU gather.
    scale = jnp.zeros((outC, tile_n), jnp.float32)
    shift = jnp.zeros((outC, tile_n), jnp.float32)
    for b in range(B):
        m = idxv == b                                 # (1, tile_n)
        scale = jnp.where(m, aff[:outC, b:b + 1], scale)
        shift = jnp.where(m, aff[outC:, b:b + 1], shift)

    out_ref[...] = jnp.maximum(y_ref[...] * scale + shift, 0.0)           # ReLU


def fc_adain(x, origin_feat, latent_point_batch, params, *, tile_n=4096):
    """FCAdaINLayer forward.  x: (N, inC) f32, origin_feat: (B, featC) f32,
    latent_point_batch: (N,) int group ids in [0, B).  Returns (N, outC) f32."""
    N, inC = x.shape
    B, featC = origin_feat.shape
    outC = params["wfc"].shape[1]

    # Points live on lanes: tile must be a multiple of 128 (or the whole point axis).
    if tile_n >= N:
        tile_n = N
    else:
        tile_n = max(128, (tile_n // 128) * 128)
    grid_n = pl.cdiv(N, tile_n)

    # Wrapper-side layout plumbing (cheap): channels on sublanes, points on lanes.
    # (Optionally cast xT/wfcT to bf16 on v5e/v6e to halve x HBM traffic; kept f32 here.)
    xT = x.T                                                              # (inC, N)
    idx = latent_point_batch.astype(jnp.int32).reshape(1, N)              # (1, N)
    wfcT = params["wfc"].T                                                # (outC, inC)
    bfcT = params["bfc"].reshape(outC, 1)                                 # (outC, 1)
    w_musig = jnp.concatenate([params["wmu"], params["wsig"]], axis=1)    # (featC, 2*outC)
    b_musig = jnp.concatenate([params["bmu"], params["bsig"]], axis=1)    # (1, 2*outC)

    def full(shape):
        return pl.BlockSpec(shape, lambda i: (0, 0))

    def col_tile(r):
        return pl.BlockSpec((r, tile_n), lambda i: (0, i))

    # Pass 1: y = fc(x) persisted as (outC, N), plus per-group [scale, shift] table.
    aff, yT = pl.pallas_call(
        functools.partial(_stats_kernel, n_total=N),
        out_shape=(jax.ShapeDtypeStruct((B, 2 * outC), jnp.float32),
                   jax.ShapeDtypeStruct((outC, N), jnp.float32)),
        grid_spec=pltpu.PrefetchScalarGridSpec(
            num_scalar_prefetch=0,
            grid=(grid_n,),
            in_specs=[col_tile(inC), col_tile(1), full((B, featC)),
                      full((outC, inC)), full((outC, 1)),
                      full((featC, 2 * outC)), full((1, 2 * outC))],
            out_specs=[full((B, 2 * outC)), col_tile(outC)],
            scratch_shapes=[pltpu.VMEM((B, outC), jnp.float32),
                            pltpu.VMEM((B, outC), jnp.float32),
                            pltpu.VMEM((B, 1), jnp.float32)]),
        compiler_params=pltpu.CompilerParams(
            dimension_semantics=("arbitrary",),
            vmem_limit_bytes=32 * 1024 * 1024),
    )(xT, idx, origin_feat, wfcT, bfcT, w_musig, b_musig)

    affT = aff.T                                                          # (2*outC, B)

    # Pass 2: out = relu(y * scale[g] + shift[g]); independent per point tile.
    outT = pl.pallas_call(
        _apply_kernel,
        out_shape=jax.ShapeDtypeStruct((outC, N), jnp.float32),
        grid_spec=pltpu.PrefetchScalarGridSpec(
            num_scalar_prefetch=0,
            grid=(grid_n,),
            in_specs=[col_tile(outC), col_tile(1), full((2 * outC, B))],
            out_specs=col_tile(outC)),
        compiler_params=pltpu.CompilerParams(
            dimension_semantics=("parallel",),
            vmem_limit_bytes=32 * 1024 * 1024),
    )(yT, idx, affT)

    return outT.T                                                         # (N, outC)


def init_linear(key, fan_in, fan_out):
    # nn.Linear default: U(-1/sqrt(fan_in), 1/sqrt(fan_in)); stored transposed (fan_in, fan_out).
    kw, kb = jax.random.split(key)
    bound = 1.0 / jnp.sqrt(fan_in)
    w = jax.random.uniform(kw, (fan_in, fan_out), jnp.float32, -bound, bound)
    b = jax.random.uniform(kb, (1, fan_out), jnp.float32, -bound, bound)
    return w, b


def reference(x, origin_feat, idx, params):
    y = x @ params["wfc"] + params["bfc"]
    mu = origin_feat @ params["wmu"] + params["bmu"]
    sig = origin_feat @ params["wsig"] + params["bsig"]
    B = origin_feat.shape[0]
    counts = jnp.maximum(jax.ops.segment_sum(jnp.ones_like(y[:, :1]), idx, B), 1.0)
    mean = jax.ops.segment_sum(y, idx, B) / counts
    xc = y - mean[idx]
    var = jax.ops.segment_sum(xc * xc, idx, B) / counts
    xn = xc / jnp.sqrt(var[idx] + 1e-14)
    return jax.nn.relu(xn * sig[idx] + mu[idx])


if __name__ == "__main__":
    inC, outC, featC = 16, 3, 32
    N, B = 320, 4                      # N % tile_n != 0 -> exercises the tail-mask path

    key = jax.random.PRNGKey(0)
    k_x, k_feat, k_perm, k_fc, k_mu, k_sig = jax.random.split(key, 6)

    x = jax.random.normal(k_x, (N, inC), jnp.float32)                 # batch.x
    origin_feat = jax.random.normal(k_feat, (B, featC), jnp.float32)  # batch.origin_feat
    lpb = jnp.repeat(jnp.arange(B, dtype=jnp.int32), N // B)          # batch.latent_point_batch
    lpb = jax.random.permutation(k_perm, lpb)                         # interleave groups across tiles

    wfc, bfc = init_linear(k_fc, inC, outC)
    wmu, bmu = init_linear(k_mu, featC, outC)
    wsig, bsig = init_linear(k_sig, featC, outC)
    params = dict(wfc=wfc, bfc=bfc, wmu=wmu, bmu=bmu, wsig=wsig, bsig=bsig)

    out = fc_adain(x, origin_feat, lpb, params, tile_n=128)   # grid of 3 point tiles (last partial)
    out = jax.block_until_ready(out)

    ref = reference(x, origin_feat, lpb, params)
    assert out.shape == (N, outC)
    assert jnp.allclose(out, ref, atol=1e-4, rtol=1e-4), "mismatch vs reference"

    print("KERNEL_OK")
</pallas_src>

<mosaic_0001>
module attributes {stable_mosaic.version = 11 : i64} {
  func.func @_stats_kernel(%arg0: i32, %arg1: memref<16x128xf32, #tpu.memory_space<vmem>>, %arg2: memref<1x128xi32, #tpu.memory_space<vmem>>, %arg3: memref<4x32xf32, #tpu.memory_space<vmem>>, %arg4: memref<3x16xf32, #tpu.memory_space<vmem>>, %arg5: memref<3x1xf32, #tpu.memory_space<vmem>>, %arg6: memref<32x6xf32, #tpu.memory_space<vmem>>, %arg7: memref<1x6xf32, #tpu.memory_space<vmem>>, %arg8: memref<4x6xf32, #tpu.memory_space<vmem>>, %arg9: memref<3x128xf32, #tpu.memory_space<vmem>>, %arg10: memref<4x3xf32, #tpu.memory_space<vmem>>, %arg11: memref<4x3xf32, #tpu.memory_space<vmem>>, %arg12: memref<4x1xf32, #tpu.memory_space<vmem>>) attributes {dimension_semantics = [#tpu.dimension_semantics<arbitrary>], iteration_bounds = array<i64: 3>, scalar_prefetch = 0 : i64, scratch_operands = 3 : i64, tpu.core_type = #tpu.core_type<tc>, window_params = [{transform_indices = @transform_0, window_bounds = array<i64: 16, 128>}, {transform_indices = @transform_1, window_bounds = array<i64: 1, 128>}, {pipeline_mode = #tpu.pipeline_mode<synchronous>, transform_indices = @transform_2, window_bounds = array<i64: 4, 32>}, {pipeline_mode = #tpu.pipeline_mode<synchronous>, transform_indices = @transform_3, window_bounds = array<i64: 3, 16>}, {pipeline_mode = #tpu.pipeline_mode<synchronous>, transform_indices = @transform_4, window_bounds = array<i64: 3, 1>}, {pipeline_mode = #tpu.pipeline_mode<synchronous>, transform_indices = @transform_5, window_bounds = array<i64: 32, 6>}, {pipeline_mode = #tpu.pipeline_mode<synchronous>, transform_indices = @transform_6, window_bounds = array<i64: 1, 6>}, {pipeline_mode = #tpu.pipeline_mode<synchronous>, transform_indices = @transform_7, window_bounds = array<i64: 4, 6>}, {transform_indices = @transform_8, window_bounds = array<i64: 3, 128>}]} {
    %c0_i32 = arith.constant 0 : i32
    %0 = arith.cmpi eq, %arg0, %c0_i32 : i32
    %1 = arith.extui %0 : i1 to i32
    %c0_i32_0 = arith.constant 0 : i32
    %2 = arith.cmpi ne, %1, %c0_i32_0 : i32
    scf.if %2 {
      %cst_29 = arith.constant 0.000000e+00 : f32
      %46 = vector.broadcast %cst_29 : f32 to vector<4x3xf32>
      %c0_30 = arith.constant 0 : index
      %c0_31 = arith.constant 0 : index
      %47 = vector.load %arg10[%c0_30, %c0_31] : memref<4x3xf32, #tpu.memory_space<vmem>>, vector<4x3xf32>
      tpu.vector_store %arg10[%c0_30, %c0_31], %46 {strides = array<i32>} : memref<4x3xf32, #tpu.memory_space<vmem>>, vector<4x3xf32>,
      %cst_32 = arith.constant 0.000000e+00 : f32
      %48 = vector.broadcast %cst_32 : f32 to vector<4x3xf32>
      %c0_33 = arith.constant 0 : index
      %c0_34 = arith.constant 0 : index
      %49 = vector.load %arg11[%c0_33, %c0_34] : memref<4x3xf32, #tpu.memory_space<vmem>>, vector<4x3xf32>
      tpu.vector_store %arg11[%c0_33, %c0_34], %48 {strides = array<i32>} : memref<4x3xf32, #tpu.memory_space<vmem>>, vector<4x3xf32>,
      %cst_35 = arith.constant 0.000000e+00 : f32
      %50 = vector.broadcast %cst_35 : f32 to vector<4x1xf32>
      %c0_36 = arith.constant 0 : index
      %c0_37 = arith.constant 0 : index
      %51 = vector.load %arg12[%c0_36, %c0_37] : memref<4x1xf32, #tpu.memory_space<vmem>>, vector<4x1xf32>
      tpu.vector_store %arg12[%c0_36, %c0_37], %50 {strides = array<i32>} : memref<4x1xf32, #tpu.memory_space<vmem>>, vector<4x1xf32>,
    } else {
    }
    %c0 = arith.constant 0 : index
    %c0_1 = arith.constant 0 : index
    %3 = vector.load %arg4[%c0, %c0_1] : memref<3x16xf32, #tpu.memory_space<vmem>>, vector<3x16xf32>
    %c0_2 = arith.constant 0 : index
    %c0_3 = arith.constant 0 : index
    %4 = vector.load %arg1[%c0_2, %c0_3] : memref<16x128xf32, #tpu.memory_space<vmem>>, vector<16x128xf32>
    %cst = arith.constant dense<0.000000e+00> : vector<3x128xf32>
    %5 = tpu.matmul %3, %4, %cst {dimension_numbers = #tpu.dot_dimension_numbers<[1], [0], [0], [1], [0, 0, 1, 1], [], []>} : vector<3x16xf32>, vector<16x128xf32>, vector<3x128xf32> -> vector<3x128xf32>
    %c0_4 = arith.constant 0 : index
    %c0_5 = arith.constant 0 : index
    %6 = vector.load %arg5[%c0_4, %c0_5] : memref<3x1xf32, #tpu.memory_space<vmem>>, vector<3x1xf32>
    %7 = vector.broadcast %6 : vector<3x1xf32> to vector<3x128xf32>
    %8 = arith.addf %5, %7 : vector<3x128xf32>
    %c128_i32 = arith.constant 128 : i32
    %9 = arith.muli %arg0, %c128_i32 : i32
    %10 = tpu.iota {dimensions = array<i32: 1>} : vector<1x128xi32>
    %11 = vector.broadcast %9 : i32 to vector<1x128xi32>
    %12 = arith.addi %11, %10 : vector<1x128xi32>
    %c320_i32 = arith.constant 320 : i32
    %13 = vector.broadcast %c320_i32 : i32 to vector<1x128xi32>
    %14 = arith.cmpi slt, %12, %13 : vector<1x128xi32>
    %cst_6 = arith.constant 0.000000e+00 : f32
    %15 = vector.shape_cast %14 : vector<1x128xi1> to vector<1x128xi1>
    %16 = vector.broadcast %15 : vector<1x128xi1> to vector<3x128xi1>
    %17 = vector.broadcast %cst_6 : f32 to vector<3x128xf32>
    %18 = arith.select %16, %8, %17 : vector<3x128xi1>, vector<3x128xf32>
    %c0_7 = arith.constant 0 : index
    %c0_8 = arith.constant 0 : index
    %19 = vector.load %arg9[%c0_7, %c0_8] : memref<3x128xf32, #tpu.memory_space<vmem>>, vector<3x128xf32>
    tpu.vector_store %arg9[%c0_7, %c0_8], %18 {strides = array<i32>} : memref<3x128xf32, #tpu.memory_space<vmem>>, vector<3x128xf32>,
    %20 = tpu.iota {dimensions = array<i32: 0>} : vector<4x128xi32>
    %c0_9 = arith.constant 0 : index
    %c0_10 = arith.constant 0 : index
    %21 = vector.load %arg2[%c0_9, %c0_10] : memref<1x128xi32, #tpu.memory_space<vmem>>, vector<1x128xi32>
    %22 = vector.broadcast %21 : vector<1x128xi32> to vector<4x128xi32>
    %23 = arith.cmpi eq, %20, %22 : vector<4x128xi32>
    %24 = vector.broadcast %14 : vector<1x128xi1> to vector<4x128xi1>
    %25 = arith.andi %23, %24 : vector<4x128xi1>
    %cst_11 = arith.constant 1.000000e+00 : f32
    %cst_12 = arith.constant 0.000000e+00 : f32
    %26 = vector.broadcast %cst_11 : f32 to vector<4x128xf32>
    %27 = vector.broadcast %cst_12 : f32 to vector<4x128xf32>
    %28 = arith.select %25, %26, %27 : vector<4x128xi1>, vector<4x128xf32>
    %c0_13 = arith.constant 0 : index
    %c0_14 = arith.constant 0 : index
    %29 = vector.load %arg10[%c0_13, %c0_14] : memref<4x3xf32, #tpu.memory_space<vmem>>, vector<4x3xf32>
    %cst_15 = arith.constant dense<0.000000e+00> : vector<4x3xf32>
    %30 = tpu.matmul %28, %18, %cst_15 {dimension_numbers = #tpu.dot_dimension_numbers<[1], [1], [0], [0], [0, 0, 1, 0], [], []>} : vector<4x128xf32>, vector<3x128xf32>, vector<4x3xf32> -> vector<4x3xf32>
    %31 = arith.addf %29, %30 : vector<4x3xf32>
    %c0_16 = arith.constant 0 : index
    %c0_17 = arith.constant 0 : index
    %32 = vector.load %arg10[%c0_16, %c0_17] : memref<4x3xf32, #tpu.memory_space<vmem>>, vector<4x3xf32>
    tpu.vector_store %arg10[%c0_16, %c0_17], %31 {strides = array<i32>} : memref<4x3xf32, #tpu.memory_space<vmem>>, vector<4x3xf32>,
    %c0_18 = arith.constant 0 : index
    %c0_19 = arith.constant 0 : index
    %33 = vector.load %arg11[%c0_18, %c0_19] : memref<4x3xf32, #tpu.memory_space<vmem>>, vector<4x3xf32>
    %34 = arith.mulf %18, %18 : vector<3x128xf32>
    %cst_20 = arith.constant dense<0.000000e+00> : vector<4x3xf32>
    %35 = tpu.matmul %28, %34, %cst_20 {dimension_numbers = #tpu.dot_dimension_numbers<[1], [1], [0], [0], [0, 0, 1, 0], [], []>} : vector<4x128xf32>, vector<3x128xf32>, vector<4x3xf32> -> vector<4x3xf32>
    %36 = arith.addf %33, %35 : vector<4x3xf32>
    %c0_21 = arith.constant 0 : index
    %c0_22 = arith.constant 0 : index
    %37 = vector.load %arg11[%c0_21, %c0_22] : memref<4x3xf32, #tpu.memory_space<vmem>>, vector<4x3xf32>
    tpu.vector_store %arg11[%c0_21, %c0_22], %36 {strides = array<i32>} : memref<4x3xf32, #tpu.memory_space<vmem>>, vector<4x3xf32>,
    %c0_23 = arith.constant 0 : index
    %c0_24 = arith.constant 0 : index
    %38 = vector.load %arg12[%c0_23, %c0_24] : memref<4x1xf32, #tpu.memory_space<vmem>>, vector<4x1xf32>
    %cst_25 = arith.constant dense<0.000000e+00> : vector<4xf32>
    %39 = vector.multi_reduction <add>, %28, %cst_25 [1] : vector<4x128xf32> to vector<4xf32>
    %40 = vector.shape_cast %39 : vector<4xf32> to vector<4x1xf32>
    %41 = arith.addf %38, %40 : vector<4x1xf32>
    %c0_26 = arith.constant 0 : index
    %c0_27 = arith.constant 0 : index
    %42 = vector.load %arg12[%c0_26, %c0_27] : memref<4x1xf32, #tpu.memory_space<vmem>>, vector<4x1xf32>
    tpu.vector_store %arg12[%c0_26, %c0_27], %41 {strides = array<i32>} : memref<4x1xf32, #tpu.memory_space<vmem>>, vector<4x1xf32>,
    %c2_i32 = arith.constant 2 : i32
    %43 = arith.cmpi eq, %arg0, %c2_i32 : i32
    %44 = arith.extui %43 : i1 to i32
    %c0_i32_28 = arith.constant 0 : i32
    %45 = arith.cmpi ne, %44, %c0_i32_28 : i32
    scf.if %45 {
      %c0_29 = arith.constant 0 : index
      %c0_30 = arith.constant 0 : index
      %46 = vector.load %arg12[%c0_29, %c0_30] : memref<4x1xf32, #tpu.memory_space<vmem>>, vector<4x1xf32>
      %cst_31 = arith.constant 1.000000e+00 : f32
      %47 = vector.broadcast %cst_31 : f32 to vector<4x1xf32>
      %48 = arith.maximumf %46, %47 : vector<4x1xf32>
      %cst_32 = arith.constant 1.000000e+00 : f32
      %49 = vector.broadcast %cst_32 : f32 to vector<4x1xf32>
      %50 = arith.divf %49, %48 : vector<4x1xf32>
      %c0_33 = arith.constant 0 : index
      %c0_34 = arith.constant 0 : index
      %51 = vector.load %arg10[%c0_33, %c0_34] : memref<4x3xf32, #tpu.memory_space<vmem>>, vector<4x3xf32>
      %52 = vector.broadcast %50 : vector<4x1xf32> to vector<4x3xf32>
      %53 = arith.mulf %51, %52 : vector<4x3xf32>
      %c0_35 = arith.constant 0 : index
      %c0_36 = arith.constant 0 : index
      %54 = vector.load %arg11[%c0_35, %c0_36] : memref<4x3xf32, #tpu.memory_space<vmem>>, vector<4x3xf32>
      %55 = vector.broadcast %50 : vector<4x1xf32> to vector<4x3xf32>
      %56 = arith.mulf %54, %55 : vector<4x3xf32>
      %57 = arith.mulf %53, %53 : vector<4x3xf32>
      %58 = arith.subf %56, %57 : vector<4x3xf32>
      %cst_37 = arith.constant 0.000000e+00 : f32
      %59 = vector.broadcast %cst_37 : f32 to vector<4x3xf32>
      %60 = arith.maximumf %58, %59 : vector<4x3xf32>
      %cst_38 = arith.constant 9.99999982E-15 : f32
      %61 = vector.broadcast %cst_38 : f32 to vector<4x3xf32>
      %62 = arith.addf %60, %61 : vector<4x3xf32>
      %63 = math.rsqrt %62 : vector<4x3xf32>
      %c0_39 = arith.constant 0 : index
      %c0_40 = arith.constant 0 : index
      %64 = vector.load %arg3[%c0_39, %c0_40] : memref<4x32xf32, #tpu.memory_space<vmem>>, vector<4x32xf32>
      %c0_41 = arith.constant 0 : index
      %c0_42 = arith.constant 0 : index
      %65 = vector.load %arg6[%c0_41, %c0_42] : memref<32x6xf32, #tpu.memory_space<vmem>>, vector<32x6xf32>
      %cst_43 = arith.constant dense<0.000000e+00> : vector<4x6xf32>
      %66 = tpu.matmul %64, %65, %cst_43 {dimension_numbers = #tpu.dot_dimension_numbers<[1], [0], [0], [1], [0, 0, 1, 1], [], []>} : vector<4x32xf32>, vector<32x6xf32>, vector<4x6xf32> -> vector<4x6xf32>
      %c0_44 = arith.constant 0 : index
      %c0_45 = arith.constant 0 : index
      %67 = vector.load %arg7[%c0_44, %c0_45] : memref<1x6xf32, #tpu.memory_space<vmem>>, vector<1x6xf32>
      %68 = vector.broadcast %67 : vector<1x6xf32> to vector<4x6xf32>
      %69 = arith.addf %66, %68 : vector<4x6xf32>
      %70 = vector.extract_strided_slice %69 {offsets = [0, 3], sizes = [4, 3], strides = [1, 1]} : vector<4x6xf32> to vector<4x3xf32>
      %71 = arith.mulf %70, %63 : vector<4x3xf32>
      %72 = vector.extract_strided_slice %69 {offsets = [0, 0], sizes = [4, 3], strides = [1, 1]} : vector<4x6xf32> to vector<4x3xf32>
      %73 = arith.mulf %53, %71 : vector<4x3xf32>
      %74 = arith.subf %72, %73 : vector<4x3xf32>
      %c0_46 = arith.constant 0 : index
      %c0_47 = arith.constant 0 : index
      %75 = vector.load %arg8[%c0_46, %c0_47] : memref<4x6xf32, #tpu.memory_space<vmem>>, vector<4x3xf32>
      tpu.vector_store %arg8[%c0_46, %c0_47], %71 {strides = array<i32>} : memref<4x6xf32, #tpu.memory_space<vmem>>, vector<4x3xf32>,
      %c0_48 = arith.constant 0 : index
      %c3 = arith.constant 3 : index
      %76 = vector.load %arg8[%c0_48, %c3] : memref<4x6xf32, #tpu.memory_space<vmem>>, vector<4x3xf32>
      tpu.vector_store %arg8[%c0_48, %c3], %74 {strides = array<i32>} : memref<4x6xf32, #tpu.memory_space<vmem>>, vector<4x3xf32>,
    } else {
    }
    return
  }
  func.func @transform_0(%arg0: i32) -> (i32, i32) {
    %c0_i32 = arith.constant 0 : i32
    %c0_i32_0 = arith.constant 0 : i32
    return %c0_i32, %arg0 : i32, i32
  }
  func.func @transform_1(%arg0: i32) -> (i32, i32) {
    %c0_i32 = arith.constant 0 : i32
    %c0_i32_0 = arith.constant 0 : i32
    return %c0_i32, %arg0 : i32, i32
  }
  func.func @transform_2(%arg0: i32) -> (i32, i32) {
    %c0_i32 = arith.constant 0 : i32
    %c0_i32_0 = arith.constant 0 : i32
    %c0_i32_1 = arith.constant 0 : i32
    return %c0_i32, %c0_i32_0 : i32, i32
  }
  func.func @transform_3(%arg0: i32) -> (i32, i32) {
    %c0_i32 = arith.constant 0 : i32
    %c0_i32_0 = arith.constant 0 : i32
    %c0_i32_1 = arith.constant 0 : i32
    return %c0_i32, %c0_i32_0 : i32, i32
  }
  func.func @transform_4(%arg0: i32) -> (i32, i32) {
    %c0_i32 = arith.constant 0 : i32
    %c0_i32_0 = arith.constant 0 : i32
    %c0_i32_1 = arith.constant 0 : i32
    return %c0_i32, %c0_i32_0 : i32, i32
  }
  func.func @transform_5(%arg0: i32) -> (i32, i32) {
    %c0_i32 = arith.constant 0 : i32
    %c0_i32_0 = arith.constant 0 : i32
    %c0_i32_1 = arith.constant 0 : i32
    return %c0_i32, %c0_i32_0 : i32, i32
  }
  func.func @transform_6(%arg0: i32) -> (i32, i32) {
    %c0_i32 = arith.constant 0 : i32
    %c0_i32_0 = arith.constant 0 : i32
    %c0_i32_1 = arith.constant 0 : i32
    return %c0_i32, %c0_i32_0 : i32, i32
  }
  func.func @transform_7(%arg0: i32) -> (i32, i32) {
    %c0_i32 = arith.constant 0 : i32
    %c0_i32_0 = arith.constant 0 : i32
    %c0_i32_1 = arith.constant 0 : i32
    return %c0_i32, %c0_i32_0 : i32, i32
  }
  func.func @transform_8(%arg0: i32) -> (i32, i32) {
    %c0_i32 = arith.constant 0 : i32
    %c0_i32_0 = arith.constant 0 : i32
    return %c0_i32, %arg0 : i32, i32
  }
}

</mosaic_0001>

<llo_original>
// kernel: tpu_custom_call.1
$region0: #{tpu_custom_call.1}
  #allocation0 [shape = 'u32[]', space=smem, size = 0x4, offset = 0x4, fixed_abs, tag = 'smem constant byte address 0x4 - core index']
  #allocation1 [shape = 'u32[144,128]{1,0:T(1,128)}', space=vmem, size = 0x12000, scoped, tag = 'internal scratch']
  #allocation2 [shape = 'f32[4,3]{1,0:T(4,128)}', space=vmem, size = 0x800, scoped, tag = 'scratch operand']
  #allocation3 [shape = 'f32[4,3]{1,0:T(4,128)}', space=vmem, size = 0x800, scoped, tag = 'scratch operand']
  #allocation4 [shape = 'f32[4,1]{1,0:T(4,128)}', space=vmem, size = 0x800, scoped, tag = 'scratch operand']
  %s0 = inlined_call_operand.hbm [shape: f32[16,320], index: 0, kind: input, shape index: {}]
  %s1 = inlined_call_operand.vmem [shape: s32[1,320], index: 1, kind: input, shape index: {}]
  %s2 = inlined_call_operand.vmem [shape: f32[4,32], index: 2, kind: input, shape index: {}]
  %s3 = inlined_call_operand.vmem [shape: f32[3,16], index: 3, kind: input, shape index: {}]
  %s4 = inlined_call_operand.vmem [shape: f32[3,1], index: 4, kind: input, shape index: {}]
  %s5 = inlined_call_operand.vmem [shape: f32[32,6], index: 5, kind: input, shape index: {}]
  %s6 = inlined_call_operand.vmem [shape: f32[1,6], index: 6, kind: input, shape index: {}]
  %s7 = inlined_call_operand.hbm [shape: f32[4,6], index: 7, kind: output, shape index: {0}]
  %s8 = inlined_call_operand.hbm [shape: f32[3,320], index: 8, kind: output, shape index: {1}]
  %9 = xla_tuple %s7, %s8
  %s10 = sld [smem:[#allocation0]]
  $region81: #{tpu_custom_call.1} parent=0
    _
  %s12 = ssub.s32 1, %s10
  %s13 = scalar_select 0, %s12, %s10
  $region1: #{tpu_custom_call.1} parent=0
    #allocation5 [shape = 'u8[16384]{0}', space=vmem, size = 0x4000, scoped, tag = 'input window, operand 0']
    #allocation6 [shape = 's32[2]{0}', space=sflag, size = 0x8, scoped, tag = 'scoped memory for tpu_custom_call.1']
    #allocation7 [shape = 's32[2]{0}', space=sflag, size = 0x8, scoped, tag = 'scoped memory for tpu_custom_call.1']
    #allocation8 [shape = 'u8[2048]{0}', space=vmem, size = 0x800, scoped, tag = 'output window, operand 0, single buffered']
    #allocation9 [shape = 'u8[4096]{0}', space=vmem, size = 0x1000, scoped, tag = 'output window, operand 1']
    #allocation10 [shape = 's32[2]{0}', space=sflag, size = 0x8, scoped, tag = 'scoped memory for tpu_custom_call.1']
    %14 = vsyncpa [#allocation6], 0
    %s15 = scalar_lea.sflag [#allocation6], 1
    %16 = vsyncpa %s15, 0
    %17 = vsyncpa [#allocation7], 0
    %18 = vsyncpa [#allocation10], 0
    %s19 = scalar_lea.sflag [#allocation10], 1
    %20 = vsyncpa %s19, 0
    loop: start=0, step=1, limit=5
    $region2: #{tpu_custom_call.1} parent=1 // loop_pre_header
      _
    $region3: #{tpu_custom_call.1} parent=1 // loop_header
      %s22 = sphi 0, %s26
      %p23 = scmp.ge.s32.totalorder %s22, 5
      %s32 = sphi 0, %s34
      %s35 = sphi 0, %s32
      %s36 = sphi 0, %s35
      %s52 = sphi 0, %s36
      %s58 = sphi 0, %s60
      %s61 = sphi 0, %s58
      %s62 = sphi 0, %s61
      %s78 = sphi 0, %s62
      %s82 = sphi 0, %s82
      %s84 = sphi 0, %s82
      %s85 = sphi 0, %s84
      %s99 = sphi 0, %s85
      %s103 = sphi 0, %s103
      %s105 = sphi 0, %s103
      %s106 = sphi 0, %s105
      %s120 = sphi 0, %s106
      %s124 = sphi 0, %s124
      %s126 = sphi 0, %s124
      %s127 = sphi 0, %s126
      %s141 = sphi 0, %s127
      %s145 = sphi 0, %s145
      %s147 = sphi 0, %s145
      %s148 = sphi 0, %s147
      %s162 = sphi 0, %s148
      %s166 = sphi 0, %s166
      %s168 = sphi 0, %s166
      %s169 = sphi 0, %s168
      %s183 = sphi 0, %s169
      %s187 = sphi 0, %s187
      %s189 = sphi 0, %s187
      %s190 = sphi 0, %s189
      %s204 = sphi 0, %s190
      %s210 = sphi 0, %s212
      %s213 = sphi 0, %s210
      %s214 = sphi 0, %s213
      %s230 = sphi 0, %s214
    $region4: #{tpu_custom_call.1} parent=1 // loop_header_branch
      %25 = sbr.rel (%p23) target = $region8
    $region5: #{tpu_custom_call.1} parent=1 // loop_body
      %s27 = ssub.s32 %s22, 1
      %s28 = ssub.s32 %s22, 2
      %s29 = sadd.s32 %s22, 1
      %s30 = ssub.s32 %s22, %s29
      %p31 = scmp.eq.s32.totalorder %s30, 0
      %s33 = sadd.s32 %s32, 1
      %s34 = scalar_select %p31, %s32, %s33
      %p37 = pneg %p31
      %p38 = scmp.eq.s32.totalorder %s22, 2
      %p39 = por %p37, %p38
      %p40 = scmp.ne.s32.totalorder %s32, %s35
      %p41 = scmp.eq.s32.totalorder %s22, 0
      %p42 = por %p40, %p41
      %p43 = scmp.ne.s32.totalorder %s32, %s35
      %p44 = scmp.eq.s32.totalorder %s27, 2
      %p45 = por %p43, %p44
      %p46 = scmp.ne.s32.totalorder %s35, %s36
      %p47 = scmp.eq.s32.totalorder %s27, 0
      %p48 = por %p46, %p47
      %p49 = scmp.ne.s32.totalorder %s35, %s36
      %p50 = scmp.eq.s32.totalorder %s28, 2
      %p51 = por %p49, %p50
      %p53 = scmp.ne.s32.totalorder %s36, %s52
      %p54 = scmp.eq.s32.totalorder %s28, 0
      %p55 = por %p53, %p54
      %s56 = ssub.s32 %s22, %s29
      %p57 = scmp.eq.s32.totalorder %s56, 0
      %s59 = sadd.s32 %s58, 1
      %s60 = scalar_select %p57, %s58, %s59
      %p63 = pneg %p57
      %p64 = scmp.eq.s32.totalorder %s22, 2
      %p65 = por %p63, %p64
      %p66 = scmp.ne.s32.totalorder %s58, %s61
      %p67 = scmp.eq.s32.totalorder %s22, 0
      %p68 = por %p66, %p67
      %p69 = scmp.ne.s32.totalorder %s58, %s61
      %p70 = scmp.eq.s32.totalorder %s27, 2
      %p71 = por %p69, %p70
      %p72 = scmp.ne.s32.totalorder %s61, %s62
      %p73 = scmp.eq.s32.totalorder %s27, 0
      %p74 = por %p72, %p73
      %p75 = scmp.ne.s32.totalorder %s61, %s62
      %p76 = scmp.eq.s32.totalorder %s28, 2
      %p77 = por %p75, %p76
      %p79 = scmp.ne.s32.totalorder %s62, %s78
      %p80 = scmp.eq.s32.totalorder %s28, 0
      %p81 = por %p79, %p80
      %s83 = sadd.s32 %s82, 1
      %p86 = scmp.eq.s32.totalorder %s22, 2
      %p87 = scmp.ne.s32.totalorder %s82, %s84
      %p88 = scmp.eq.s32.totalorder %s22, 0
      %p89 = por %p87, %p88
      %p90 = scmp.ne.s32.totalorder %s82, %s84
      %p91 = scmp.eq.s32.totalorder %s27, 2
      %p92 = por %p90, %p91
      %p93 = scmp.ne.s32.totalorder %s84, %s85
      %p94 = scmp.eq.s32.totalorder %s27, 0
      %p95 = por %p93, %p94
      %p96 = scmp.ne.s32.totalorder %s84, %s85
      %p97 = scmp.eq.s32.totalorder %s28, 2
      %p98 = por %p96, %p97
      %p100 = scmp.ne.s32.totalorder %s85, %s99
      %p101 = scmp.eq.s32.totalorder %s28, 0
      %p102 = por %p100, %p101
      %s104 = sadd.s32 %s103, 1
      %p107 = scmp.eq.s32.totalorder %s22, 2
      %p108 = scmp.ne.s32.totalorder %s103, %s105
      %p109 = scmp.eq.s32.totalorder %s22, 0
      %p110 = por %p108, %p109
      %p111 = scmp.ne.s32.totalorder %s103, %s105
      %p112 = scmp.eq.s32.totalorder %s27, 2
      %p113 = por %p111, %p112
      %p114 = scmp.ne.s32.totalorder %s105, %s106
      %p115 = scmp.eq.s32.totalorder %s27, 0
      %p116 = por %p114, %p115
      %p117 = scmp.ne.s32.totalorder %s105, %s106
      %p118 = scmp.eq.s32.totalorder %s28, 2
      %p119 = por %p117, %p118
      %p121 = scmp.ne.s32.totalorder %s106, %s120
      %p122 = scmp.eq.s32.totalorder %s28, 0
      %p123 = por %p121, %p122
      %s125 = sadd.s32 %s124, 1
      %p128 = scmp.eq.s32.totalorder %s22, 2
      %p129 = scmp.ne.s32.totalorder %s124, %s126
      %p130 = scmp.eq.s32.totalorder %s22, 0
      %p131 = por %p129, %p130
      %p132 = scmp.ne.s32.totalorder %s124, %s126
      %p133 = scmp.eq.s32.totalorder %s27, 2
      %p134 = por %p132, %p133
      %p135 = scmp.ne.s32.totalorder %s126, %s127
      %p136 = scmp.eq.s32.totalorder %s27, 0
      %p137 = por %p135, %p136
      %p138 = scmp.ne.s32.totalorder %s126, %s127
      %p139 = scmp.eq.s32.totalorder %s28, 2
      %p140 = por %p138, %p139
      %p142 = scmp.ne.s32.totalorder %s127, %s141
      %p143 = scmp.eq.s32.totalorder %s28, 0
      %p144 = por %p142, %p143
      %s146 = sadd.s32 %s145, 1
      %p149 = scmp.eq.s32.totalorder %s22, 2
      %p150 = scmp.ne.s32.totalorder %s145, %s147
      %p151 = scmp.eq.s32.totalorder %s22, 0
      %p152 = por %p150, %p151
      %p153 = scmp.ne.s32.totalorder %s145, %s147
      %p154 = scmp.eq.s32.totalorder %s27, 2
      %p155 = por %p153, %p154
      %p156 = scmp.ne.s32.totalorder %s147, %s148
      %p157 = scmp.eq.s32.totalorder %s27, 0
      %p158 = por %p156, %p157
      %p159 = scmp.ne.s32.totalorder %s147, %s148
      %p160 = scmp.eq.s32.totalorder %s28, 2
      %p161 = por %p159, %p160
      %p163 = scmp.ne.s32.totalorder %s148, %s162
      %p164 = scmp.eq.s32.totalorder %s28, 0
      %p165 = por %p163, %p164
      %s167 = sadd.s32 %s166, 1
      %p170 = scmp.eq.s32.totalorder %s22, 2
      %p171 = scmp.ne.s32.totalorder %s166, %s168
      %p172 = scmp.eq.s32.totalorder %s22, 0
      %p173 = por %p171, %p172
      %p174 = scmp.ne.s32.totalorder %s166, %s168
      %p175 = scmp.eq.s32.totalorder %s27, 2
      %p176 = por %p174, %p175
      %p177 = scmp.ne.s32.totalorder %s168, %s169
      %p178 = scmp.eq.s32.totalorder %s27, 0
      %p179 = por %p177, %p178
      %p180 = scmp.ne.s32.totalorder %s168, %s169
      %p181 = scmp.eq.s32.totalorder %s28, 2
      %p182 = por %p180, %p181
      %p184 = scmp.ne.s32.totalorder %s169, %s183
      %p185 = scmp.eq.s32.totalorder %s28, 0
      %p186 = por %p184, %p185
      %s188 = sadd.s32 %s187, 1
      %p191 = scmp.eq.s32.totalorder %s22, 2
      %p192 = scmp.ne.s32.totalorder %s187, %s189
      %p193 = scmp.eq.s32.totalorder %s22, 0
      %p194 = por %p192, %p193
      %p195 = scmp.ne.s32.totalorder %s187, %s189
      %p196 = scmp.eq.s32.totalorder %s27, 2
      %p197 = por %p195, %p196
      %p198 = scmp.ne.s32.totalorder %s189, %s190
      %p199 = scmp.eq.s32.totalorder %s27, 0
      %p200 = por %p198, %p199
      %p201 = scmp.ne.s32.totalorder %s189, %s190
      %p202 = scmp.eq.s32.totalorder %s28, 2
      %p203 = por %p201, %p202
      %p205 = scmp.ne.s32.totalorder %s190, %s204
      %p206 = scmp.eq.s32.totalorder %s28, 0
      %p207 = por %p205, %p206
      %s208 = ssub.s32 %s22, %s29
      %p209 = scmp.eq.s32.totalorder %s208, 0
      %s211 = sadd.s32 %s210, 1
      %s212 = scalar_select %p209, %s210, %s211
      %p215 = pneg %p209
      %p216 = scmp.eq.s32.totalorder %s22, 2
      %p217 = por %p215, %p216
      %p218 = scmp.ne.s32.totalorder %s210, %s213
      %p219 = scmp.eq.s32.totalorder %s22, 0
      %p220 = por %p218, %p219
      %p221 = scmp.ne.s32.totalorder %s210, %s213
      %p222 = scmp.eq.s32.totalorder %s27, 2
      %p223 = por %p221, %p222
      %p224 = scmp.ne.s32.totalorder %s213, %s214
      %p225 = scmp.eq.s32.totalorder %s27, 0
      %p226 = por %p224, %p225
      %p227 = scmp.ne.s32.totalorder %s213, %s214
      %p228 = scmp.eq.s32.totalorder %s28, 2
      %p229 = por %p227, %p228
      %p231 = scmp.ne.s32.totalorder %s214, %s230
      %p232 = scmp.eq.s32.totalorder %s28, 0
      %p233 = por %p231, %p232
      %p234 = scmp.le.s32.totalorder 1, %s22
      %p235 = scmp.lt.s32.totalorder %s22, 4
      %p236 = pnand %p234, %p235
      %p237 = pneg %p236
      // Predicated region
      $region9: #{tpu_custom_call.1} parent=5 // pred_check
        _
      $region10: #{tpu_custom_call.1} parent=5 // pred_check_branch
        %239 = sbr.rel (%p236) target = $region12
      $region11: #{tpu_custom_call.1} parent=5 // pred_region
        %s240 = ssub.s32 %s22, 1
        // Predicated region
        $region13: #{tpu_custom_call.1} parent=11 // pred_check
          %p241 = pneg %p95
        $region14: #{tpu_custom_call.1} parent=11 // pred_check_branch
          %243 = sbr.rel (%p241) target = $region16
        $region15: #{tpu_custom_call.1} parent=11 // pred_region
          _
        $region16: #{tpu_custom_call.1} parent=11 // pred_fallthru
          _
        // Predicated region
        $region17: #{tpu_custom_call.1} parent=11 // pred_check
          %p244 = pneg %p116
        $region18: #{tpu_custom_call.1} parent=11 // pred_check_branch
          %246 = sbr.rel (%p244) target = $region20
        $region19: #{tpu_custom_call.1} parent=11 // pred_region
          _
        $region20: #{tpu_custom_call.1} parent=11 // pred_fallthru
          _
        // Predicated region
        $region21: #{tpu_custom_call.1} parent=11 // pred_check
          %p247 = pneg %p137
        $region22: #{tpu_custom_call.1} parent=11 // pred_check_branch
          %249 = sbr.rel (%p247) target = $region24
        $region23: #{tpu_custom_call.1} parent=11 // pred_region
          _
        $region24: #{tpu_custom_call.1} parent=11 // pred_fallthru
          _
        // Predicated region
        $region25: #{tpu_custom_call.1} parent=11 // pred_check
          %p250 = pneg %p158
        $region26: #{tpu_custom_call.1} parent=11 // pred_check_branch
          %252 = sbr.rel (%p250) target = $region28
        $region27: #{tpu_custom_call.1} parent=11 // pred_region
          _
        $region28: #{tpu_custom_call.1} parent=11 // pred_fallthru
          _
        // Predicated region
        $region29: #{tpu_custom_call.1} parent=11 // pred_check
          %p253 = pneg %p179
        $region30: #{tpu_custom_call.1} parent=11 // pred_check_branch
          %255 = sbr.rel (%p253) target = $region32
        $region31: #{tpu_custom_call.1} parent=11 // pred_region
          _
        $region32: #{tpu_custom_call.1} parent=11 // pred_fallthru
          _
      $region12: #{tpu_custom_call.1} parent=5 // pred_fallthru
        _
      %p256 = scmp.lt.s32.totalorder %s22, 3
      // Predicated region
      $region33: #{tpu_custom_call.1} parent=5 // pred_check
        %p257 = pneg %p256
      $region34: #{tpu_custom_call.1} parent=5 // pred_check_branch
        %259 = sbr.rel (%p257) target = $region36
      $region35: #{tpu_custom_call.1} parent=5 // pred_region
        // Predicated region
        $region37: #{tpu_custom_call.1} parent=35 // pred_check
          %p260 = pneg %p42
        $region38: #{tpu_custom_call.1} parent=35 // pred_check_branch
          %262 = sbr.rel (%p260) target = $region40
        $region39: #{tpu_custom_call.1} parent=35 // pred_region
          %s263 = sand.u32 %s32, 1
          %s264 = scalar_lea.sflag [#allocation6], %s263
          %s265 = sand.u32 %s32, 1
          %s266 = smul.addr %s265, 16
          %s267 = scalar_lea.vmem [#allocation5], %s266
          %s269 = ssub.s32 256, 256
          %270 = vsyncadd %s264, %s269
          %s271 = smul.addr %s22, 128
          %s272 = scalar_lea.hbm %s0, %s271
          %s273 = sshll.u32 %s267, 4
          %s274 = int_to_ptr.vmem [resolvable:$true] %s273
          %279 = dma.hbm_to_vmem [thread:$0]  %s272, 256, %s274, %s264, 384, 128, 8
        $region40: #{tpu_custom_call.1} parent=35 // pred_fallthru
          _
        // Predicated region
        $region41: #{tpu_custom_call.1} parent=35 // pred_check
          %p280 = pneg %p68
        $region42: #{tpu_custom_call.1} parent=35 // pred_check_branch
          %282 = sbr.rel (%p280) target = $region44
        $region43: #{tpu_custom_call.1} parent=35 // pred_region
          %p283 = scmp.lt.s32.totalorder %s22, 2
          %s284 = scalar_select %p283, %s22, 2
          %s285 = scalar_lea.vmem %s1, %s284
        $region44: #{tpu_custom_call.1} parent=35 // pred_fallthru
          _
      $region36: #{tpu_custom_call.1} parent=5 // pred_fallthru
        _
      %p286 = scmp.le.s32.totalorder 1, %s22
      %p287 = scmp.lt.s32.totalorder %s22, 4
      %p288 = pnand %p286, %p287
      %p289 = pneg %p288
      // Predicated region
      $region45: #{tpu_custom_call.1} parent=5 // pred_check
        _
      $region46: #{tpu_custom_call.1} parent=5 // pred_check_branch
        %291 = sbr.rel (%p288) target = $region48
      $region47: #{tpu_custom_call.1} parent=5 // pred_region
        %s292 = ssub.s32 %s22, 1
        %s293 = sand.u32 %s35, 1
        %s294 = scalar_lea.sflag [#allocation6], %s293
        %s295 = sand.u32 %s35, 1
        %s296 = smul.addr %s295, 16
        %s297 = scalar_lea.vmem [#allocation5], %s296
        // Predicated region
        $region49: #{tpu_custom_call.1} parent=47 // pred_check
          %p298 = pneg %p48
        $region50: #{tpu_custom_call.1} parent=47 // pred_check_branch
          %300 = sbr.rel (%p298) target = $region52
        $region51: #{tpu_custom_call.1} parent=47 // pred_region
          %301 = dma.done %s294, 256
        $region52: #{tpu_custom_call.1} parent=47 // pred_fallthru
          _
        %s302 = sand.u32 %s35, 1
        %s303 = scalar_lea.sflag [#allocation6], %s302
        %s304 = sand.u32 %s35, 1
        %s305 = smul.addr %s304, 16
        %s306 = scalar_lea.vmem [#allocation5], %s305
        %p307 = pneg %p48
        %p308 = pneg %p45
        %p309 = scmp.lt.s32.totalorder %s27, 2
        %s310 = scalar_select %p309, %s27, 2
        %s311 = scalar_lea.vmem %s1, %s310
        %p312 = pneg %p74
        %p313 = pneg %p71
        %p314 = pneg %p95
        %p315 = pneg %p92
        %p316 = pneg %p116
        %p317 = pneg %p113
        %p318 = pneg %p137
        %p319 = pneg %p134
        %p320 = pneg %p158
        %p321 = pneg %p155
        %p322 = pneg %p179
        %p323 = pneg %p176
        %p324 = pneg %p200
        %p325 = pneg %p197
        %p326 = pneg %p226
        %p327 = pneg %p223
        %s328 = sand.u32 %s213, 1
        %s329 = scalar_lea.sflag [#allocation10], %s328
        %s330 = sand.u32 %s213, 1
        %s331 = smul.addr %s330, 4
        %s332 = scalar_lea.vmem [#allocation9], %s331
        %p333 = scmp.lt.s32.totalorder %s27, 2
        %s334 = scalar_select %p333, %s27, 2
        %s335 = scalar_lea.vmem %s1, %s334
        %p336 = scmp.eq.s32.totalorder %s27, 0
        // Predicated region
        $region53: #{tpu_custom_call.1} parent=47 // pred_check
          %p337 = pneg %p336
        $region54: #{tpu_custom_call.1} parent=47 // pred_check_branch
          %339 = sbr.rel (%p337) target = $region56
        $region55: #{tpu_custom_call.1} parent=47 // pred_region
          %vm340 = vcmask 19456
          %341 = vst.msk [vmem:[#allocation2] sm:$0xf] %vm340, 0.0
          %342 = vst.msk [vmem:[#allocation3] sm:$0xf] %vm340, 0.0
          %vm343 = vcmask 3072
          %344 = vst.msk [vmem:[#allocation4] sm:$0xf] %vm343, 0.0
        $region56: #{tpu_custom_call.1} parent=47 // pred_fallthru
          _
        %v345 = vld [vmem:[%s3] sm:$0x7]
        %v346 = vld [vmem:[%s297] sm:$0xff]
        %v347 = vld [vmem:[%s297 + $0x8] sm:$0xff]
        %v348 = vld [vmem:[%s4] sm:$0x7]
        %350 = vset.pattern.permute.xlu0 0
        %351 = vperm.xlu0 %350, %v348
        %v352 = vpop.permute.xlu0 %351
        %vm354 = vcmask 130048
        %v356 = vsel %vm354, %v345, 0
        %358 = vmatprep.subr.mxu0 0.0
        %359 = vmatpush1.msra.mxu0 %v346
        %360 = vmatprep.subr.mxu0 0.0
        %361 = vmatpush1.msra.mxu0 %v347
        %362 = vmatprep.subr.mxu0 0.0
        %363 = vmatpush1.msra.mxu0 0.0
        %364 = vmatprep.subr.mxu0 0.0
        %365 = vmatpush1.msra.mxu0 0.0
        %366 = vmatprep.subr.mxu0 0.0
        %367 = vmatpush1.msra.mxu0 0.0
        %368 = vmatprep.subr.mxu0 0.0
        %369 = vmatpush1.msra.mxu0 0.0
        %370 = vmatprep.subr.mxu0 0.0
        %371 = vmatpush1.msra.mxu0 0.0
        %372 = vmatprep.subr.mxu0 0.0
        %373 = vmatpush1.msra.mxu0 0.0
        %374 = vmatprep.subr.mxu0 0.0
        %375 = vmatpush1.msra.mxu0 0.0
        %376 = vmatprep.subr.mxu0 0.0
        %377 = vmatpush1.msra.mxu0 0.0
        %378 = vmatprep.subr.mxu0 0.0
        %379 = vmatpush1.msra.mxu0 0.0
        %380 = vmatprep.subr.mxu0 0.0
        %381 = vmatpush1.msra.mxu0 0.0
        %382 = vmatprep.subr.mxu0 0.0
        %383 = vmatpush1.msra.mxu0 0.0
        %384 = vmatprep.subr.mxu0 0.0
        %385 = vmatpush1.msra.mxu0 0.0
        %386 = vmatprep.subr.mxu0 0.0
        %387 = vmatpush1.msra.mxu0 0.0
        %388 = vmatprep.subr.mxu0 0.0
        %389 = vmatpush1.msra.mxu0 0.0
        %390 = vmatprep.subr.mxu0 0.0
        %391 = vmatpush1.msra.mxu0 0.0
        %392 = vmatprep.subr.mxu0 0.0
        %393 = vmatpush1.msra.mxu0 0.0
        %394 = vmatprep.subr.mxu0 0.0
        %395 = vmatpush1.msra.mxu0 0.0
        %396 = vmatprep.subr.mxu0 0.0
        %397 = vmatpush1.msra.mxu0 0.0
        %398 = vmatprep.subr.mxu0 0.0
        %399 = vmatpush1.msra.mxu0 0.0
        %400 = vmatprep.subr.mxu0 0.0
        %401 = vmatpush1.msra.mxu0 0.0
        %402 = vmatprep.subr.mxu0 0.0
        %403 = vmatpush1.msra.mxu0 0.0
        %404 = vmatprep.subr.mxu0 0.0
        %405 = vmatpush1.msra.mxu0 0.0
        %406 = vmatprep.subr.mxu0 0.0
        %407 = vmatpush1.msra.mxu0 0.0
        %408 = vmatprep.subr.mxu0 0.0
        %409 = vmatpush1.msra.mxu0 0.0
        %410 = vmatprep.subr.mxu0 0.0
        %411 = vmatpush1.msra.mxu0 0.0
        %412 = vmatprep.subr.mxu0 0.0
        %413 = vmatpush1.msra.mxu0 0.0
        %414 = vmatprep.subr.mxu0 0.0
        %415 = vmatpush1.msra.mxu0 0.0
        %416 = vmatprep.subr.mxu0 0.0
        %417 = vmatpush1.msra.mxu0 0.0
        %418 = vmatprep.subr.mxu0 0.0
        %419 = vmatpush1.msra.mxu0 0.0
        %420 = vmatprep.subr.mxu0 0.0
        %421 = vmatpush1.msra.mxu0 0.0
        %422 = vmatprep.mubr.f32.mxu0 0.0
        %423 = vmatmul.mubr.f32.gmra.mrb[0].mxu0 %v356
        %v424 = vpop.f32.mrb[0].mxu0
        %v425 = vadd.f32 %v352, %v424
        %v426 = vpop.f32.mrb[0].mxu0
        %427 = vdwg.mxu0
        %s428 = smul.u32 %s27, 128
        %v429 = vlaneseq
        %v430 = vand.u32 %v429, 127
        %v431 = vstv %s428
        %v432 = vadd.s32 %v431, %v430
        %vm433 = vcmp.lt.s32.totalorder %v432, 320
        %v434 = vsel %vm433, 1, 0
        %vm435 = vcmp.eq.s32.totalorder %v434, 1
        %v436 = vsel %vm435, %v425, 0.0
        %437 = vst [vmem:[%s332] sm:$0x7] %v436
        %v438 = vlaneseq
        %v439 = vshrl.u32 %v438, 7
        %v440 = vld [vmem:[%s335] sm:$0x1]
        %v441 = vlaneseq
        %v442 = vshrl.u32 %v441, 7
        %v443 = vsub.s32 0, %v442
        %v444 = vrot.slane %v440, %v443
        %vm445 = vcmp.eq.s32.totalorder %v439, %v444
        %vm446 = vmand %vm445, %vm435
        %v447 = vsel %vm446, 1.0, 0.0
        %v448 = vld [vmem:[#allocation2] sm:$0xf]
        %449 = vmatprep.subr.mxu0 0.0
        %450 = vmatpush1.xpose.msra.mxu0 %v436
        %451 = vmatprep.subr.mxu0 0.0
        %452 = vmatpush1.xpose.msra.mxu0 0.0
        %453 = vmatprep.subr.mxu0 0.0
        %454 = vmatpush1.xpose.msra.mxu0 0.0
        %455 = vmatprep.subr.mxu0 0.0
        %456 = vmatpush1.xpose.msra.mxu0 0.0
        %457 = vmatprep.subr.mxu0 0.0
        %458 = vmatpush1.xpose.msra.mxu0 0.0
        %459 = vmatprep.subr.mxu0 0.0
        %460 = vmatpush1.xpose.msra.mxu0 0.0
        %461 = vmatprep.subr.mxu0 0.0
        %462 = vmatpush1.xpose.msra.mxu0 0.0
        %463 = vmatprep.subr.mxu0 0.0
        %464 = vmatpush1.xpose.msra.mxu0 0.0
        %465 = vmatprep.subr.mxu0 0.0
        %466 = vmatpush1.xpose.msra.mxu0 0.0
        %467 = vmatprep.subr.mxu0 0.0
        %468 = vmatpush1.xpose.msra.mxu0 0.0
        %469 = vmatprep.subr.mxu0 0.0
        %470 = vmatpush1.xpose.msra.mxu0 0.0
        %471 = vmatprep.subr.mxu0 0.0
        %472 = vmatpush1.xpose.msra.mxu0 0.0
        %473 = vmatprep.subr.mxu0 0.0
        %474 = vmatpush1.xpose.msra.mxu0 0.0
        %475 = vmatprep.subr.mxu0 0.0
        %476 = vmatpush1.xpose.msra.mxu0 0.0
        %477 = vmatprep.subr.mxu0 0.0
        %478 = vmatpush1.xpose.msra.mxu0 0.0
        %479 = vmatprep.subr.mxu0 0.0
        %480 = vmatpush1.xpose.msra.mxu0 0.0
        %481 = vmatprep.subr.mxu0 0.0
        %482 = vmatpush1.xpose.msra.mxu0 0.0
        %483 = vmatprep.subr.mxu0 0.0
        %484 = vmatpush1.xpose.msra.mxu0 0.0
        %485 = vmatprep.subr.mxu0 0.0
        %486 = vmatpush1.xpose.msra.mxu0 0.0
        %487 = vmatprep.subr.mxu0 0.0
        %488 = vmatpush1.xpose.msra.mxu0 0.0
        %489 = vmatprep.subr.mxu0 0.0
        %490 = vmatpush1.xpose.msra.mxu0 0.0
        %491 = vmatprep.subr.mxu0 0.0
        %492 = vmatpush1.xpose.msra.mxu0 0.0
        %493 = vmatprep.subr.mxu0 0.0
        %494 = vmatpush1.xpose.msra.mxu0 0.0
        %495 = vmatprep.subr.mxu0 0.0
        %496 = vmatpush1.xpose.msra.mxu0 0.0
        %497 = vmatprep.subr.mxu0 0.0
        %498 = vmatpush1.xpose.msra.mxu0 0.0
        %499 = vmatprep.subr.mxu0 0.0
        %500 = vmatpush1.xpose.msra.mxu0 0.0
        %501 = vmatprep.subr.mxu0 0.0
        %502 = vmatpush1.xpose.msra.mxu0 0.0
        %503 = vmatprep.subr.mxu0 0.0
        %504 = vmatpush1.xpose.msra.mxu0 0.0
        %505 = vmatprep.subr.mxu0 0.0
        %506 = vmatpush1.xpose.msra.mxu0 0.0
        %507 = vmatprep.subr.mxu0 0.0
        %508 = vmatpush1.xpose.msra.mxu0 0.0
        %509 = vmatprep.subr.mxu0 0.0
        %510 = vmatpush1.xpose.msra.mxu0 0.0
        %511 = vmatprep.subr.mxu0 0.0
        %512 = vmatpush1.xpose.msra.mxu0 0.0
        %513 = vmatprep.mubr.f32.mxu0 0.0
        %514 = vmatmul.mubr.f32.gmra.mrb[0].mxu0 %v447
        %v515 = vpop.f32.mrb[0].mxu0
        %v516 = vadd.f32 0.0, %v515
        %v517 = vpop.f32.mrb[0].mxu0
        %518 = vdwg.mxu0
        %v519 = vadd.f32 %v448, %v516
        %vm520 = vcmask 19456
        %521 = vst.msk [vmem:[#allocation2] sm:$0xf] %vm520, %v519
        %v522 = vld [vmem:[#allocation3] sm:$0xf]
        %v523 = vmul.f32 %v436, %v436
        %524 = vmatprep.subr.mxu0 0.0
        %525 = vmatpush1.xpose.msra.mxu0 %v523
        %526 = vmatprep.subr.mxu0 0.0
        %527 = vmatpush1.xpose.msra.mxu0 0.0
        %528 = vmatprep.subr.mxu0 0.0
        %529 = vmatpush1.xpose.msra.mxu0 0.0
        %530 = vmatprep.subr.mxu0 0.0
        %531 = vmatpush1.xpose.msra.mxu0 0.0
        %532 = vmatprep.subr.mxu0 0.0
        %533 = vmatpush1.xpose.msra.mxu0 0.0
        %534 = vmatprep.subr.mxu0 0.0
        %535 = vmatpush1.xpose.msra.mxu0 0.0
        %536 = vmatprep.subr.mxu0 0.0
        %537 = vmatpush1.xpose.msra.mxu0 0.0
        %538 = vmatprep.subr.mxu0 0.0
        %539 = vmatpush1.xpose.msra.mxu0 0.0
        %540 = vmatprep.subr.mxu0 0.0
        %541 = vmatpush1.xpose.msra.mxu0 0.0
        %542 = vmatprep.subr.mxu0 0.0
        %543 = vmatpush1.xpose.msra.mxu0 0.0
        %544 = vmatprep.subr.mxu0 0.0
        %545 = vmatpush1.xpose.msra.mxu0 0.0
        %546 = vmatprep.subr.mxu0 0.0
        %547 = vmatpush1.xpose.msra.mxu0 0.0
        %548 = vmatprep.subr.mxu0 0.0
        %549 = vmatpush1.xpose.msra.mxu0 0.0
        %550 = vmatprep.subr.mxu0 0.0
        %551 = vmatpush1.xpose.msra.mxu0 0.0
        %552 = vmatprep.subr.mxu0 0.0
        %553 = vmatpush1.xpose.msra.mxu0 0.0
        %554 = vmatprep.subr.mxu0 0.0
        %555 = vmatpush1.xpose.msra.mxu0 0.0
        %556 = vmatprep.subr.mxu0 0.0
        %557 = vmatpush1.xpose.msra.mxu0 0.0
        %558 = vmatprep.subr.mxu0 0.0
        %559 = vmatpush1.xpose.msra.mxu0 0.0
        %560 = vmatprep.subr.mxu0 0.0
        %561 = vmatpush1.xpose.msra.mxu0 0.0
        %562 = vmatprep.subr.mxu0 0.0
        %563 = vmatpush1.xpose.msra.mxu0 0.0
        %564 = vmatprep.subr.mxu0 0.0
        %565 = vmatpush1.xpose.msra.mxu0 0.0
        %566 = vmatprep.subr.mxu0 0.0
        %567 = vmatpush1.xpose.msra.mxu0 0.0
        %568 = vmatprep.subr.mxu0 0.0
        %569 = vmatpush1.xpose.msra.mxu0 0.0
        %570 = vmatprep.subr.mxu0 0.0
        %571 = vmatpush1.xpose.msra.mxu0 0.0
        %572 = vmatprep.subr.mxu0 0.0
        %573 = vmatpush1.xpose.msra.mxu0 0.0
        %574 = vmatprep.subr.mxu0 0.0
        %575 = vmatpush1.xpose.msra.mxu0 0.0
        %576 = vmatprep.subr.mxu0 0.0
        %577 = vmatpush1.xpose.msra.mxu0 0.0
        %578 = vmatprep.subr.mxu0 0.0
        %579 = vmatpush1.xpose.msra.mxu0 0.0
        %580 = vmatprep.subr.mxu0 0.0
        %581 = vmatpush1.xpose.msra.mxu0 0.0
        %582 = vmatprep.subr.mxu0 0.0
        %583 = vmatpush1.xpose.msra.mxu0 0.0
        %584 = vmatprep.subr.mxu0 0.0
        %585 = vmatpush1.xpose.msra.mxu0 0.0
        %586 = vmatprep.subr.mxu0 0.0
        %587 = vmatpush1.xpose.msra.mxu0 0.0
        %588 = vmatprep.mubr.f32.mxu0 0.0
        %589 = vmatmul.mubr.f32.gmra.mrb[0].mxu0 %v447
        %v590 = vpop.f32.mrb[0].mxu0
        %v591 = vadd.f32 0.0, %v590
        %v592 = vpop.f32.mrb[0].mxu0
        %593 = vdwg.mxu0
        %v594 = vadd.f32 %v522, %v591
        %595 = vst.msk [vmem:[#allocation3] sm:$0xf] %vm520, %v594
        %v596 = vld [vmem:[#allocation4] sm:$0xf]
        %vm597 = vcmask 1043456
        %v598 = vsel %vm597, %v447, 0.0
        %599 = vadd.xlane.f32.xlu0 %v598
        %v600 = vpop.xlane.xlu0 %599
        %v601 = vadd.f32 %v596, %v600
        %vm602 = vcmask 3072
        %603 = vst.msk [vmem:[#allocation4] sm:$0xf] %vm602, %v601
        %p604 = scmp.eq.s32.totalorder %s27, 2
        // Predicated region
        $region57: #{tpu_custom_call.1} parent=47 // pred_check
          %p605 = pneg %p604
        $region58: #{tpu_custom_call.1} parent=47 // pred_check_branch
          %607 = sbr.rel (%p605) target = $region60
        $region59: #{tpu_custom_call.1} parent=47 // pred_region
          %v608 = vld [vmem:[#allocation4] sm:$0xf]
          %v609 = vmax.f32 %v608, 1.0
          %v610 = vrcp.pop %v609
          %v611 = vmul.f32 1.0, %v610
          %v612 = vld [vmem:[#allocation2] sm:$0xf]
          %614 = vset.pattern.permute.xlu0 0
          %615 = vperm.xlu0 %614, %v611
          %v616 = vpop.permute.xlu0 %615
          %v618 = vmul.f32 %v612, %v616
          %v619 = vld [vmem:[#allocation3] sm:$0xf]
          %v620 = vmul.f32 %v619, %v616
          %v621 = vmul.f32 %v618, %v618
          %v622 = vsub.f32 %v620, %v621
          %v623 = vmax.f32 %v622, 0.0
          %v624 = vadd.f32 %v623, 1e-14
          %v625 = vrsqrt.pop %v624
          %v626 = vld [vmem:[%s2] sm:$0xf]
          %v627 = vld [vmem:[%s5] sm:$0xff]
          %v628 = vld [vmem:[%s5 + $0x8] sm:$0xff]
          %v629 = vld [vmem:[%s5 + $0x10] sm:$0xff]
          %v630 = vld [vmem:[%s5 + $0x18] sm:$0xff]
          %v631 = vld [vmem:[%s6] sm:$0x1]
          %v633 = vlaneseq
          %v634 = vshrl.u32 %v633, 7
          %v635 = vsub.s32 0, %v634
          %v636 = vrot.slane %v631, %v635
          %vm638 = vcmask 261120
          %v640 = vsel %vm638, %v626, 0
          %642 = vmatprep.subr.mxu0 0.0
          %643 = vmatpush1.msra.mxu0 %v627
          %644 = vmatprep.subr.mxu0 0.0
          %645 = vmatpush1.msra.mxu0 %v628
          %646 = vmatprep.subr.mxu0 0.0
          %647 = vmatpush1.msra.mxu0 %v629
          %648 = vmatprep.subr.mxu0 0.0
          %649 = vmatpush1.msra.mxu0 %v630
          %650 = vmatprep.subr.mxu0 0.0
          %651 = vmatpush1.msra.mxu0 0.0
          %652 = vmatprep.subr.mxu0 0.0
          %653 = vmatpush1.msra.mxu0 0.0
          %654 = vmatprep.subr.mxu0 0.0
          %655 = vmatpush1.msra.mxu0 0.0
          %656 = vmatprep.subr.mxu0 0.0
          %657 = vmatpush1.msra.mxu0 0.0
          %658 = vmatprep.subr.mxu0 0.0
          %659 = vmatpush1.msra.mxu0 0.0
          %660 = vmatprep.subr.mxu0 0.0
          %661 = vmatpush1.msra.mxu0 0.0
          %662 = vmatprep.subr.mxu0 0.0
          %663 = vmatpush1.msra.mxu0 0.0
          %664 = vmatprep.subr.mxu0 0.0
          %665 = vmatpush1.msra.mxu0 0.0
          %666 = vmatprep.subr.mxu0 0.0
          %667 = vmatpush1.msra.mxu0 0.0
          %668 = vmatprep.subr.mxu0 0.0
          %669 = vmatpush1.msra.mxu0 0.0
          %670 = vmatprep.subr.mxu0 0.0
          %671 = vmatpush1.msra.mxu0 0.0
          %672 = vmatprep.subr.mxu0 0.0
          %673 = vmatpush1.msra.mxu0 0.0
          %674 = vmatprep.subr.mxu0 0.0
          %675 = vmatpush1.msra.mxu0 0.0
          %676 = vmatprep.subr.mxu0 0.0
          %677 = vmatpush1.msra.mxu0 0.0
          %678 = vmatprep.subr.mxu0 0.0
          %679 = vmatpush1.msra.mxu0 0.0
          %680 = vmatprep.subr.mxu0 0.0
          %681 = vmatpush1.msra.mxu0 0.0
          %682 = vmatprep.subr.mxu0 0.0
          %683 = vmatpush1.msra.mxu0 0.0
          %684 = vmatprep.subr.mxu0 0.0
          %685 = vmatpush1.msra.mxu0 0.0
          %686 = vmatprep.subr.mxu0 0.0
          %687 = vmatpush1.msra.mxu0 0.0
          %688 = vmatprep.subr.mxu0 0.0
          %689 = vmatpush1.msra.mxu0 0.0
          %690 = vmatprep.subr.mxu0 0.0
          %691 = vmatpush1.msra.mxu0 0.0
          %692 = vmatprep.subr.mxu0 0.0
          %693 = vmatpush1.msra.mxu0 0.0
          %694 = vmatprep.subr.mxu0 0.0
          %695 = vmatpush1.msra.mxu0 0.0
          %696 = vmatprep.subr.mxu0 0.0
          %697 = vmatpush1.msra.mxu0 0.0
          %698 = vmatprep.subr.mxu0 0.0
          %699 = vmatpush1.msra.mxu0 0.0
          %700 = vmatprep.subr.mxu0 0.0
          %701 = vmatpush1.msra.mxu0 0.0
          %702 = vmatprep.subr.mxu0 0.0
          %703 = vmatpush1.msra.mxu0 0.0
          %704 = vmatprep.subr.mxu0 0.0
          %705 = vmatpush1.msra.mxu0 0.0
          %706 = vmatprep.mubr.f32.mxu0 0.0
          %707 = vmatmul.mubr.f32.gmra.mrb[0].mxu0 %v640
          %v708 = vpop.f32.mrb[0].mxu0
          %v709 = vadd.f32 %v636, %v708
          %v710 = vpop.f32.mrb[0].mxu0
          %711 = vdwg.mxu0
          %713 = vrot.lane.b32.xlu0 %v625, 3
          %v714 = vpop.permute.xlu0 %713
          %v716 = vmul.f32 %v709, %v714
          %718 = vrot.lane.b32.xlu0 %v716, 125
          %v719 = vpop.permute.xlu0 %718
          %v721 = vmul.f32 %v618, %v719
          %v722 = vsub.f32 %v709, %v721
          %723 = vst.msk [vmem:[#allocation8] sm:$0xf] %vm520, %v719
          %725 = vrot.lane.b32.xlu0 %v722, 3
          %v726 = vpop.permute.xlu0 %725
          %vm728 = vcmask 44056
          %729 = vst.msk [vmem:[#allocation8] sm:$0xf] %vm728, %v726
        $region60: #{tpu_custom_call.1} parent=47 // pred_fallthru
          _
        %s730 = sand.u32 %s213, 1
        %s731 = scalar_lea.sflag [#allocation10], %s730
        %s732 = sand.u32 %s213, 1
        %s733 = smul.addr %s732, 4
        %s734 = scalar_lea.vmem [#allocation9], %s733
        // Predicated region
        $region61: #{tpu_custom_call.1} parent=47 // pred_check
          %p735 = pneg %p197
        $region62: #{tpu_custom_call.1} parent=47 // pred_check_branch
          %737 = sbr.rel (%p735) target = $region64
        $region63: #{tpu_custom_call.1} parent=47 // pred_region
          %s739 = ssub.s32 64, 64
          %740 = vsyncadd [#allocation7], %s739
          %s742 = sshll.u32 [#allocation8], 4
          %s743 = int_to_ptr.vmem [resolvable:$true] %s742
          %745 = dma.vmem_to_hbm [thread:$0]  %s743, 64, %s7, [#allocation7]
        $region64: #{tpu_custom_call.1} parent=47 // pred_fallthru
          _
        // Predicated region
        $region65: #{tpu_custom_call.1} parent=47 // pred_check
          %p746 = pneg %p223
        $region66: #{tpu_custom_call.1} parent=47 // pred_check_branch
          %748 = sbr.rel (%p746) target = $region68
        $region67: #{tpu_custom_call.1} parent=47 // pred_region
          %s750 = ssub.s32 64, 64
          %751 = vsyncadd %s731, %s750
          %s752 = smul.addr %s27, 64
          %s753 = scalar_lea.hbm %s8, %s752
          %s755 = sshll.u32 %s734, 4
          %s756 = int_to_ptr.vmem [resolvable:$true] %s755
          %758 = dma.vmem_to_hbm [thread:$0]  %s756, 64, %s753, %s731
        $region68: #{tpu_custom_call.1} parent=47 // pred_fallthru
          _
        // Predicated region
        $region69: #{tpu_custom_call.1} parent=47 // pred_check
          %p759 = pneg %p197
        $region70: #{tpu_custom_call.1} parent=47 // pred_check_branch
          %761 = sbr.rel (%p759) target = $region72
        $region71: #{tpu_custom_call.1} parent=47 // pred_region
          %762 = dma.done [#allocation7], 64
        $region72: #{tpu_custom_call.1} parent=47 // pred_fallthru
          _
      $region48: #{tpu_custom_call.1} parent=5 // pred_fallthru
        _
      %p763 = scmp.le.s32.totalorder 2, %s22
      // Predicated region
      $region73: #{tpu_custom_call.1} parent=5 // pred_check
        %p764 = pneg %p763
      $region74: #{tpu_custom_call.1} parent=5 // pred_check_branch
        %766 = sbr.rel (%p764) target = $region76
      $region75: #{tpu_custom_call.1} parent=5 // pred_region
        %s767 = ssub.s32 %s22, 2
        // Predicated region
        $region77: #{tpu_custom_call.1} parent=75 // pred_check
          %p768 = pneg %p229
        $region78: #{tpu_custom_call.1} parent=75 // pred_check_branch
          %770 = sbr.rel (%p768) target = $region80
        $region79: #{tpu_custom_call.1} parent=75 // pred_region
          %s771 = sand.u32 %s214, 1
          %s772 = scalar_lea.sflag [#allocation10], %s771
          %s773 = sand.u32 %s214, 1
          %s774 = smul.addr %s773, 4
          %s775 = scalar_lea.vmem [#allocation9], %s774
          %776 = dma.done %s772, 64
        $region80: #{tpu_custom_call.1} parent=75 // pred_fallthru
          _
      $region76: #{tpu_custom_call.1} parent=5 // pred_fallthru
        _
    $region6: #{tpu_custom_call.1} parent=1 // loop_footer
      %s26 = sadd.s32 1, %s22
    $region7: #{tpu_custom_call.1} parent=1 // loop_footer_branch
      %21 = sbr.rel target = $region3
    $region8: #{tpu_custom_call.1} parent=1 // loop_exit
      _
    %777 = vsyncpa [#allocation6], 1
    %s778 = scalar_lea.sflag [#allocation6], 1
    %779 = vsyncpa %s778, 1
    %780 = vsyncpa [#allocation7], 1
    %s781 = scalar_lea.sflag [#allocation7], 1
    %782 = vsyncpa %s781, 1
    %783 = vsyncpa [#allocation10], 1
    %s784 = scalar_lea.sflag [#allocation10], 1
    %785 = vsyncpa %s784, 1

</llo_original>
